<compile_context>
chip_gen: v7x
topology: tpu7x:2x2x1
jax: 0.10.0
libtpu: 0.0.40
codegen_flags: <defaults>
</compile_context>

<pallas_src>
import functools

import jax
import jax.numpy as jnp
import numpy as np
from jax.experimental import pallas as pl
from jax.experimental.pallas import tpu as pltpu

_LANE = 128
_SUBLANE = 8
_TILE_BUDGET_BYTES = 32 * 1024 * 1024   # working budget used to pick tiles
_VMEM_LIMIT_BYTES = 48 * 1024 * 1024    # scoped VMEM request (v5e/v6e/v7x safe)


def _round_up(x, m):
    return ((x + m - 1) // m) * m


def _leaky_relu(h):
    # vmul + vmax instead of jnp.where (vcmp + vselect).
    return jnp.maximum(h, 0.2 * h)


# ---------------------------------------------------------------------------
# Kernel 1: batch-row-tiled path. x arrives as one contiguous 2-D block of
# row_tile*N flattened rows; the set reduction completes inside the block.
# ---------------------------------------------------------------------------
def _rows_kernel(x_ref, w1_ref, b1_ref, w2_ref, b2_ref, w3_ref, b3_ref,
                 out_ref, *, n_set, mm_dtype):
    x = x_ref[...]                                            # (rt*N, D_in)
    h = jnp.dot(x.astype(mm_dtype), w1_ref[...],
                preferred_element_type=jnp.float32) + b1_ref[...]
    h = _leaky_relu(h)
    h = jnp.dot(h.astype(mm_dtype), w2_ref[...],
                preferred_element_type=jnp.float32) + b2_ref[...]
    h = _leaky_relu(h)                                        # (rt*N, Hp) f32
    rt = out_ref.shape[0]
    acc = h.reshape(rt, n_set, h.shape[-1]).sum(axis=1)       # (rt, Hp)
    # Layer 3 hoisted past the set sum; 1/len(x) and N*b3 are folded into
    # w3/b3 by the wrapper.
    out_ref[...] = jnp.dot(acc.astype(mm_dtype), w3_ref[...],
                           preferred_element_type=jnp.float32) + b3_ref[...]


# ---------------------------------------------------------------------------
# Kernel 2: set-streaming path. The "arbitrary" grid axis walks N in chunks of
# n_chunk; the post-layer-2 sum lives in a VMEM accumulator across steps.
# ---------------------------------------------------------------------------
def _chunked_kernel(x_ref, w1_ref, b1_ref, w2_ref, b2_ref, w3_ref, b3_ref,
                    out_ref, acc_ref, *, mm_dtype):
    k = pl.program_id(0)

    @pl.when(k == 0)
    def _init():
        acc_ref[...] = jnp.zeros_like(acc_ref)

    b, nt, d_in = x_ref.shape
    x = x_ref[...].reshape(b * nt, d_in)
    h = jnp.dot(x.astype(mm_dtype), w1_ref[...],
                preferred_element_type=jnp.float32) + b1_ref[...]
    h = _leaky_relu(h)
    h = jnp.dot(h.astype(mm_dtype), w2_ref[...],
                preferred_element_type=jnp.float32) + b2_ref[...]
    h = _leaky_relu(h)                                        # (B*nt, Hp)
    acc_ref[...] += h.reshape(b, nt, h.shape[-1]).sum(axis=1)

    @pl.when(k == pl.num_programs(0) - 1)
    def _finalize():
        out_ref[...] = jnp.dot(acc_ref[...].astype(mm_dtype), w3_ref[...],
                               preferred_element_type=jnp.float32) + b3_ref[...]


def mean_mlp_encoder(x, params, *, use_bf16_matmul=False,
                     row_tile=None, n_chunk=None):
    """x: (B, N, D_in) float32 (PyTorch layout). Returns (B, hidden_dim) f32."""
    B, N, D_in = x.shape
    w1, b1, w2, b2, w3, b3 = params
    H = w3.shape[1]

    mm_dtype = jnp.bfloat16 if use_bf16_matmul else jnp.float32
    f32b = 4

    # ---- lane-dense padded widths (zero padding => exact results) ----------
    D1p = _round_up(w1.shape[1], _LANE)    # layer-1 output width (= input_dim)
    Hp = _round_up(H, _LANE)               # hidden width (layer-2/3 output)

    def pad_w(w, rows, cols):
        return jnp.pad(w, ((0, rows - w.shape[0]), (0, cols - w.shape[1])))

    def pad_b(b, cols):
        return jnp.pad(b, (0, cols - b.shape[0])).reshape(1, cols)

    inv_scale = 1.0 / float(B)             # PyTorch quirk: len(x_list) == B
    w1p = pad_w(w1, D_in, D1p).astype(mm_dtype)
    b1p = pad_b(b1, D1p).astype(jnp.float32)
    w2p = pad_w(w2, D1p, Hp).astype(mm_dtype)
    b2p = pad_b(b2, Hp).astype(jnp.float32)
    # Fold the final scaling and the N-times-added bias into layer 3.
    w3p = (pad_w(w3, Hp, Hp) * inv_scale).astype(mm_dtype)
    b3p = (pad_b(b3, Hp) * (float(N) * inv_scale)).astype(jnp.float32)
    weights = (w1p, b1p, w2p, b2p, w3p, b3p)

    # Constant operands are never re-fetched (constant index_map) but the
    # default pipeline still reserves two VMEM buffers each -> budget at 2x.
    weight_bytes = 2 * sum(int(z.size) * z.dtype.itemsize for z in weights)

    # Advisory cost estimate for XLA's scheduler.
    flops = 2 * B * N * (D_in * D1p + D1p * Hp) + 2 * B * Hp * Hp
    bytes_accessed = (B * N * D_in * x.dtype.itemsize
                      + weight_bytes // 2 + B * Hp * f32b)
    cost = pl.CostEstimate(flops=flops, transcendentals=0,
                           bytes_accessed=bytes_accessed)

    # ---- VMEM-aware tile selection ------------------------------------------
    def _rows_fit(rt):
        per_block = (2 * rt * N * D_in          # x block, double-buffered
                     + rt * N * (D1p + Hp)      # live layer-1/2 activations
                     + 2 * rt * Hp) * f32b      # out block, double-buffered
        return per_block + weight_bytes <= _TILE_BUDGET_BYTES

    def _pick_row_tile():
        if B <= _SUBLANE:
            return B if _rows_fit(B) else None
        # Largest multiple-of-8 tile that fits; keep >= 2 grid steps when
        # B >= 16 so v7x can shard the parallel axis across its 2 TCs.
        max_rt = min(_round_up(pl.cdiv(B, 2), _SUBLANE), 512)
        best = None
        rt = _SUBLANE
        while rt <= max_rt:
            if _rows_fit(rt):
                best = rt
            rt += _SUBLANE
        return best

    def _chunk_fit(nt):
        per_block = (2 * B * nt * D_in
                     + B * nt * (D1p + Hp)
                     + 3 * B * Hp) * f32b       # acc scratch + 2x out block
        return per_block + weight_bytes <= _TILE_BUDGET_BYTES

    def _pick_n_chunk():
        # Largest multiple-of-8 divisor of N (< N) that fits the budget.
        best = None
        nt = _SUBLANE
        while nt < N:
            if N % nt == 0 and _chunk_fit(nt):
                best = nt
            nt += _SUBLANE
        return best if best is not None else N

    nt = n_chunk
    rt = row_tile
    if nt is None and rt is None:
        rt = _pick_row_tile()
        if rt is None:
            nt = _pick_n_chunk()                    # row tile can't fit VMEM
        elif pl.cdiv(B, rt) == 1:
            probe = _pick_n_chunk()
            if probe < N:                           # small B: stream N instead
                rt, nt = None, probe                # (restores DMA/compute overlap)
    elif nt is not None:
        rt = None                                   # explicit n_chunk wins

    def _const_spec(arr):
        return pl.BlockSpec(arr.shape, lambda *_: (0, 0))

    if rt is not None:
        # ---------------- batch-row-tiled path (flattened 2-D x) ------------
        x2 = x.reshape(B * N, D_in)                 # free metadata reshape
        grid_b = pl.cdiv(B, rt)
        kernel = functools.partial(_rows_kernel, n_set=N, mm_dtype=mm_dtype)
        out_p = pl.pallas_call(
            kernel,
            out_shape=jax.ShapeDtypeStruct((B, Hp), jnp.float32),
            grid_spec=pltpu.PrefetchScalarGridSpec(
                num_scalar_prefetch=0,
                grid=(grid_b,),
                in_specs=[pl.BlockSpec((rt * N, D_in), lambda i: (i, 0))]
                         + [_const_spec(w) for w in weights],
                out_specs=pl.BlockSpec((rt, Hp), lambda i: (i, 0)),
            ),
            compiler_params=pltpu.CompilerParams(
                dimension_semantics=("parallel",),
                vmem_limit_bytes=_VMEM_LIMIT_BYTES),
            cost_estimate=cost,
        )(x2, *weights)
    else:
        # ---------------- set-streaming path (arbitrary axis + accumulator) -
        # TODO(synk): a hierarchical (batch-tile x N-chunk) grid for the
        # "large B AND huge N*D_in" corner; out of scope here.
        if nt is None:
            nt = _pick_n_chunk()
        if N % nt != 0 or (nt % _SUBLANE != 0 and nt != N):
            raise ValueError(f"n_chunk={nt} must divide N={N} and be a "
                             f"multiple of {_SUBLANE} (or equal N)")
        grid_n = N // nt
        kernel = functools.partial(_chunked_kernel, mm_dtype=mm_dtype)
        out_p = pl.pallas_call(
            kernel,
            out_shape=jax.ShapeDtypeStruct((B, Hp), jnp.float32),
            grid_spec=pltpu.PrefetchScalarGridSpec(
                num_scalar_prefetch=0,
                grid=(grid_n,),
                in_specs=[pl.BlockSpec((B, nt, D_in), lambda k: (0, k, 0))]
                         + [_const_spec(w) for w in weights],
                out_specs=pl.BlockSpec((B, Hp), lambda k: (0, 0)),
                scratch_shapes=[pltpu.VMEM((B, Hp), jnp.float32)],
            ),
            compiler_params=pltpu.CompilerParams(
                dimension_semantics=("arbitrary",),
                vmem_limit_bytes=_VMEM_LIMIT_BYTES),
            cost_estimate=cost,
        )(x, *weights)

    return out_p if Hp == H else out_p[:, :H]


def _init_params(key, input_dim, hidden_dim):
    """Deterministic init mimicking nn.Linear default U[-1/sqrt(fan_in), +)."""
    ks = jax.random.split(key, 6)

    def lin(kw, kb, fan_in, fan_out):
        bound = 1.0 / np.sqrt(fan_in)
        w = jax.random.uniform(kw, (fan_in, fan_out), jnp.float32, -bound, bound)
        b = jax.random.uniform(kb, (fan_out,), jnp.float32, -bound, bound)
        return w, b

    w1, b1 = lin(ks[0], ks[1], input_dim, input_dim)
    w2, b2 = lin(ks[2], ks[3], input_dim, hidden_dim)
    w3, b3 = lin(ks[4], ks[5], hidden_dim, hidden_dim)
    return (w1, b1, w2, b2, w3, b3)


def _reference(x, params):
    w1, b1, w2, b2, w3, b3 = params
    B, N, _ = x.shape

    def mlp(v):
        h = v @ w1 + b1
        h = jnp.where(h >= 0, h, 0.2 * h)
        h = h @ w2 + b2
        h = jnp.where(h >= 0, h, 0.2 * h)
        return h @ w3 + b3

    out = 0.0
    for i in range(N):
        out = out + mlp(x[:, i])
    return out / float(B)   # PyTorch len(x_list) == batch size


if __name__ == "__main__":
    key = jax.random.PRNGKey(0)
    kx1, kx2, kp = jax.random.split(key, 3)

    B, N, D_in, H = 2, 8, 16, 32
    params = _init_params(kp, D_in, H)

    # Config 1: tiny shapes -> batch-row-tiled path (single contiguous block).
    x1 = jax.random.normal(kx1, (B, N, D_in), dtype=jnp.float32)
    out1 = jax.block_until_ready(mean_mlp_encoder(x1, params))
    np.testing.assert_allclose(np.asarray(out1),
                               np.asarray(_reference(x1, params)),
                               rtol=1e-5, atol=1e-5)

    # Config 2: exercise the set-streaming path (inner "arbitrary" axis with a
    # VMEM accumulator): N=16 streamed as two chunks of 8.
    N2 = 16
    x2 = jax.random.normal(kx2, (B, N2, D_in), dtype=jnp.float32)
    out2 = jax.block_until_ready(mean_mlp_encoder(x2, params, n_chunk=8))
    np.testing.assert_allclose(np.asarray(out2),
                               np.asarray(_reference(x2, params)),
                               rtol=1e-5, atol=1e-5)

    print("KERNEL_OK")
</pallas_src>

<mosaic_0001>
module attributes {stable_mosaic.version = 11 : i64} {
  func.func @_rows_kernel(%arg0: i32, %arg1: memref<16x16xf32, #tpu.memory_space<vmem>>, %arg2: memref<16x128xf32, #tpu.memory_space<vmem>>, %arg3: memref<1x128xf32, #tpu.memory_space<vmem>>, %arg4: memref<128x128xf32, #tpu.memory_space<vmem>>, %arg5: memref<1x128xf32, #tpu.memory_space<vmem>>, %arg6: memref<128x128xf32, #tpu.memory_space<vmem>>, %arg7: memref<1x128xf32, #tpu.memory_space<vmem>>, %arg8: memref<2x128xf32, #tpu.memory_space<vmem>>) attributes {dimension_semantics = [#tpu.dimension_semantics<parallel>], iteration_bounds = array<i64: 1>, scalar_prefetch = 0 : i64, scratch_operands = 0 : i64, tpu.core_type = #tpu.core_type<tc>, window_params = [{transform_indices = @transform_0, window_bounds = array<i64: 16, 16>}, {pipeline_mode = #tpu.pipeline_mode<synchronous>, transform_indices = @transform_1, window_bounds = array<i64: 16, 128>}, {pipeline_mode = #tpu.pipeline_mode<synchronous>, transform_indices = @transform_2, window_bounds = array<i64: 1, 128>}, {pipeline_mode = #tpu.pipeline_mode<synchronous>, transform_indices = @transform_3, window_bounds = array<i64: 128, 128>}, {pipeline_mode = #tpu.pipeline_mode<synchronous>, transform_indices = @transform_4, window_bounds = array<i64: 1, 128>}, {pipeline_mode = #tpu.pipeline_mode<synchronous>, transform_indices = @transform_5, window_bounds = array<i64: 128, 128>}, {pipeline_mode = #tpu.pipeline_mode<synchronous>, transform_indices = @transform_6, window_bounds = array<i64: 1, 128>}, {transform_indices = @transform_7, window_bounds = array<i64: 2, 128>}]} {
    %c0 = arith.constant 0 : index
    %c0_0 = arith.constant 0 : index
    %0 = vector.load %arg1[%c0, %c0_0] : memref<16x16xf32, #tpu.memory_space<vmem>>, vector<16x16xf32>
    %c0_1 = arith.constant 0 : index
    %c0_2 = arith.constant 0 : index
    %1 = vector.load %arg2[%c0_1, %c0_2] : memref<16x128xf32, #tpu.memory_space<vmem>>, vector<16x128xf32>
    %cst = arith.constant dense<0.000000e+00> : vector<16x128xf32>
    %2 = tpu.matmul %0, %1, %cst {dimension_numbers = #tpu.dot_dimension_numbers<[1], [0], [0], [1], [0, 0, 1, 1], [], []>} : vector<16x16xf32>, vector<16x128xf32>, vector<16x128xf32> -> vector<16x128xf32>
    %c0_3 = arith.constant 0 : index
    %c0_4 = arith.constant 0 : index
    %3 = vector.load %arg3[%c0_3, %c0_4] : memref<1x128xf32, #tpu.memory_space<vmem>>, vector<1x128xf32>
    %4 = vector.broadcast %3 : vector<1x128xf32> to vector<16x128xf32>
    %5 = arith.addf %2, %4 : vector<16x128xf32>
    %cst_5 = arith.constant 2.000000e-01 : f32
    %6 = vector.broadcast %cst_5 : f32 to vector<16x128xf32>
    %7 = arith.mulf %6, %5 : vector<16x128xf32>
    %8 = arith.maximumf %5, %7 : vector<16x128xf32>
    %c0_6 = arith.constant 0 : index
    %c0_7 = arith.constant 0 : index
    %9 = vector.load %arg4[%c0_6, %c0_7] : memref<128x128xf32, #tpu.memory_space<vmem>>, vector<128x128xf32>
    %cst_8 = arith.constant dense<0.000000e+00> : vector<16x128xf32>
    %10 = tpu.matmul %8, %9, %cst_8 {dimension_numbers = #tpu.dot_dimension_numbers<[1], [0], [0], [1], [0, 0, 1, 1], [], []>} : vector<16x128xf32>, vector<128x128xf32>, vector<16x128xf32> -> vector<16x128xf32>
    %c0_9 = arith.constant 0 : index
    %c0_10 = arith.constant 0 : index
    %11 = vector.load %arg5[%c0_9, %c0_10] : memref<1x128xf32, #tpu.memory_space<vmem>>, vector<1x128xf32>
    %12 = vector.broadcast %11 : vector<1x128xf32> to vector<16x128xf32>
    %13 = arith.addf %10, %12 : vector<16x128xf32>
    %cst_11 = arith.constant 2.000000e-01 : f32
    %14 = vector.broadcast %cst_11 : f32 to vector<16x128xf32>
    %15 = arith.mulf %14, %13 : vector<16x128xf32>
    %16 = arith.maximumf %13, %15 : vector<16x128xf32>
    %17 = vector.shape_cast %16 : vector<16x128xf32> to vector<2x8x128xf32>
    %cst_12 = arith.constant dense<0.000000e+00> : vector<2x128xf32>
    %18 = vector.multi_reduction <add>, %17, %cst_12 [1] : vector<2x8x128xf32> to vector<2x128xf32>
    %c0_13 = arith.constant 0 : index
    %c0_14 = arith.constant 0 : index
    %19 = vector.load %arg6[%c0_13, %c0_14] : memref<128x128xf32, #tpu.memory_space<vmem>>, vector<128x128xf32>
    %cst_15 = arith.constant dense<0.000000e+00> : vector<2x128xf32>
    %20 = tpu.matmul %18, %19, %cst_15 {dimension_numbers = #tpu.dot_dimension_numbers<[1], [0], [0], [1], [0, 0, 1, 1], [], []>} : vector<2x128xf32>, vector<128x128xf32>, vector<2x128xf32> -> vector<2x128xf32>
    %c0_16 = arith.constant 0 : index
    %c0_17 = arith.constant 0 : index
    %21 = vector.load %arg7[%c0_16, %c0_17] : memref<1x128xf32, #tpu.memory_space<vmem>>, vector<1x128xf32>
    %22 = vector.broadcast %21 : vector<1x128xf32> to vector<2x128xf32>
    %23 = arith.addf %20, %22 : vector<2x128xf32>
    %c0_18 = arith.constant 0 : index
    %c0_19 = arith.constant 0 : index
    %24 = vector.load %arg8[%c0_18, %c0_19] : memref<2x128xf32, #tpu.memory_space<vmem>>, vector<2x128xf32>
    tpu.vector_store %arg8[%c0_18, %c0_19], %23 {strides = array<i32>} : memref<2x128xf32, #tpu.memory_space<vmem>>, vector<2x128xf32>,
    return
  }
  func.func @transform_0(%arg0: i32) -> (i32, i32) {
    %c0_i32 = arith.constant 0 : i32
    %c0_i32_0 = arith.constant 0 : i32
    return %arg0, %c0_i32 : i32, i32
  }
  func.func @transform_1(%arg0: i32) -> (i32, i32) {
    %c0_i32 = arith.constant 0 : i32
    %c0_i32_0 = arith.constant 0 : i32
    %c0_i32_1 = arith.constant 0 : i32
    return %c0_i32, %c0_i32_0 : i32, i32
  }
  func.func @transform_2(%arg0: i32) -> (i32, i32) {
    %c0_i32 = arith.constant 0 : i32
    %c0_i32_0 = arith.constant 0 : i32
    %c0_i32_1 = arith.constant 0 : i32
    return %c0_i32, %c0_i32_0 : i32, i32
  }
  func.func @transform_3(%arg0: i32) -> (i32, i32) {
    %c0_i32 = arith.constant 0 : i32
    %c0_i32_0 = arith.constant 0 : i32
    %c0_i32_1 = arith.constant 0 : i32
    return %c0_i32, %c0_i32_0 : i32, i32
  }
  func.func @transform_4(%arg0: i32) -> (i32, i32) {
    %c0_i32 = arith.constant 0 : i32
    %c0_i32_0 = arith.constant 0 : i32
    %c0_i32_1 = arith.constant 0 : i32
    return %c0_i32, %c0_i32_0 : i32, i32
  }
  func.func @transform_5(%arg0: i32) -> (i32, i32) {
    %c0_i32 = arith.constant 0 : i32
    %c0_i32_0 = arith.constant 0 : i32
    %c0_i32_1 = arith.constant 0 : i32
    return %c0_i32, %c0_i32_0 : i32, i32
  }
  func.func @transform_6(%arg0: i32) -> (i32, i32) {
    %c0_i32 = arith.constant 0 : i32
    %c0_i32_0 = arith.constant 0 : i32
    %c0_i32_1 = arith.constant 0 : i32
    return %c0_i32, %c0_i32_0 : i32, i32
  }
  func.func @transform_7(%arg0: i32) -> (i32, i32) {
    %c0_i32 = arith.constant 0 : i32
    %c0_i32_0 = arith.constant 0 : i32
    return %arg0, %c0_i32 : i32, i32
  }
}

</mosaic_0001>

<llo_original>
// kernel: tpu_custom_call.1
$region0: #{tpu_custom_call.1}
  #allocation0 [shape = 'u32[]', space=smem, size = 0x4, offset = 0x4, fixed_abs, tag = 'smem constant byte address 0x4 - core index']
  #allocation1 [shape = 'u32[144,128]{1,0:T(1,128)}', space=vmem, size = 0x12000, scoped, tag = 'internal scratch']
  %s0 = inlined_call_operand.hbm [shape: f32[16,16], index: 0, kind: input, shape index: {}]
  %s1 = inlined_call_operand.hbm [shape: f32[16,128], index: 1, kind: input, shape index: {}]
  %s2 = inlined_call_operand.vmem [shape: f32[1,128], index: 2, kind: input, shape index: {}]
  %s3 = inlined_call_operand.hbm [shape: f32[128,128], index: 3, kind: input, shape index: {}]
  %s4 = inlined_call_operand.vmem [shape: f32[1,128], index: 4, kind: input, shape index: {}]
  %s5 = inlined_call_operand.hbm [shape: f32[128,128], index: 5, kind: input, shape index: {}]
  %s6 = inlined_call_operand.vmem [shape: f32[1,128], index: 6, kind: input, shape index: {}]
  %s7 = inlined_call_operand.hbm [shape: f32[2,128], index: 7, kind: output, shape index: {}]
  %s8 = sld [smem:[#allocation0]]
  $region54: #{tpu_custom_call.1} parent=0
    _
  %s10 = ssub.s32 1, %s8
  %s11 = scalar_select 0, %s10, %s8
  $region1: #{tpu_custom_call.1} parent=0
    #allocation2 [shape = 'u8[8192]{0}', space=vmem, size = 0x2000, scoped, tag = 'input window, operand 0, single buffered']
    #allocation3 [shape = 's32[1]{0}', space=sflag, size = 0x4, scoped, tag = 'scoped memory for tpu_custom_call.1']
    #allocation4 [shape = 's32[1]{0}', space=sflag, size = 0x4, scoped, tag = 'scoped memory for tpu_custom_call.1']
    #allocation5 [shape = 'u8[8192]{0}', space=vmem, size = 0x2000, scoped, tag = 'input window, operand 1, single buffered']
    #allocation6 [shape = 's32[1]{0}', space=sflag, size = 0x4, scoped, tag = 'scoped memory for tpu_custom_call.1']
    #allocation7 [shape = 'u8[65536]{0}', space=vmem, size = 0x10000, scoped, tag = 'input window, operand 3, single buffered']
    #allocation8 [shape = 'u8[65536]{0}', space=vmem, size = 0x10000, scoped, tag = 'input window, operand 5, single buffered']
    #allocation9 [shape = 's32[1]{0}', space=sflag, size = 0x4, scoped, tag = 'scoped memory for tpu_custom_call.1']
    #allocation10 [shape = 'u8[1024]{0}', space=vmem, size = 0x400, scoped, tag = 'output window, operand 0, single buffered']
    %12 = vsyncpa [#allocation3], 0
    %13 = vsyncpa [#allocation6], 0
    %14 = vsyncpa [#allocation9], 0
    %15 = vsyncpa [#allocation4], 0
    // Predicated region
    $region2: #{tpu_custom_call.1} parent=1 // pred_check
      _
    $region3: #{tpu_custom_call.1} parent=1 // pred_check_branch
      %17 = sbr.rel (0) target = $region5
    $region4: #{tpu_custom_call.1} parent=1 // pred_region
      %s19 = ssub.s32 256, 256
      %20 = vsyncadd [#allocation3], %s19
      %s21 = sshll.u32 [#allocation2], 4
      %s22 = int_to_ptr.vmem [resolvable:$true] %s21
      %27 = dma.hbm_to_vmem [thread:$0]  %s0, 256, %s22, [#allocation3], 128, 128, 8
    $region5: #{tpu_custom_call.1} parent=1 // pred_fallthru
      _
    // Predicated region
    $region6: #{tpu_custom_call.1} parent=1 // pred_check
      _
    $region7: #{tpu_custom_call.1} parent=1 // pred_check_branch
      %29 = sbr.rel (0) target = $region9
    $region8: #{tpu_custom_call.1} parent=1 // pred_region
      %s31 = ssub.s32 256, 256
      %32 = vsyncadd [#allocation6], %s31
      %s33 = sshll.u32 [#allocation5], 4
      %s34 = int_to_ptr.vmem [resolvable:$true] %s33
      %39 = dma.hbm_to_vmem [thread:$0]  %s1, 256, %s34, [#allocation6], 128, 128, 8
    $region9: #{tpu_custom_call.1} parent=1 // pred_fallthru
      _
    // Predicated region
    $region10: #{tpu_custom_call.1} parent=1 // pred_check
      _
    $region11: #{tpu_custom_call.1} parent=1 // pred_check_branch
      %41 = sbr.rel (0) target = $region13
    $region12: #{tpu_custom_call.1} parent=1 // pred_region
      _
    $region13: #{tpu_custom_call.1} parent=1 // pred_fallthru
      _
    // Predicated region
    $region14: #{tpu_custom_call.1} parent=1 // pred_check
      _
    $region15: #{tpu_custom_call.1} parent=1 // pred_check_branch
      %43 = sbr.rel (0) target = $region17
    $region16: #{tpu_custom_call.1} parent=1 // pred_region
      %s45 = ssub.s32 2048, 2048
      %46 = vsyncadd [#allocation6], %s45
      %s47 = sshll.u32 [#allocation7], 4
      %s48 = int_to_ptr.vmem [resolvable:$true] %s47
      %53 = dma.hbm_to_vmem [thread:$0]  %s3, 2048, %s48, [#allocation6], 128, 128, 8
    $region17: #{tpu_custom_call.1} parent=1 // pred_fallthru
      _
    // Predicated region
    $region18: #{tpu_custom_call.1} parent=1 // pred_check
      _
    $region19: #{tpu_custom_call.1} parent=1 // pred_check_branch
      %55 = sbr.rel (0) target = $region21
    $region20: #{tpu_custom_call.1} parent=1 // pred_region
      _
    $region21: #{tpu_custom_call.1} parent=1 // pred_fallthru
      _
    // Predicated region
    $region22: #{tpu_custom_call.1} parent=1 // pred_check
      _
    $region23: #{tpu_custom_call.1} parent=1 // pred_check_branch
      %57 = sbr.rel (0) target = $region25
    $region24: #{tpu_custom_call.1} parent=1 // pred_region
      %s59 = ssub.s32 2048, 2048
      %60 = vsyncadd [#allocation9], %s59
      %s61 = sshll.u32 [#allocation8], 4
      %s62 = int_to_ptr.vmem [resolvable:$true] %s61
      %67 = dma.hbm_to_vmem [thread:$0]  %s5, 2048, %s62, [#allocation9], 128, 128, 8
    $region25: #{tpu_custom_call.1} parent=1 // pred_fallthru
      _
    // Predicated region
    $region26: #{tpu_custom_call.1} parent=1 // pred_check
      _
    $region27: #{tpu_custom_call.1} parent=1 // pred_check_branch
      %69 = sbr.rel (0) target = $region29
    $region28: #{tpu_custom_call.1} parent=1 // pred_region
      _
    $region29: #{tpu_custom_call.1} parent=1 // pred_fallthru
      _
    // Predicated region
    $region30: #{tpu_custom_call.1} parent=1 // pred_check
      _
    $region31: #{tpu_custom_call.1} parent=1 // pred_check_branch
      %71 = sbr.rel (0) target = $region33
    $region32: #{tpu_custom_call.1} parent=1 // pred_region
      %72 = dma.done [#allocation3], 256
    $region33: #{tpu_custom_call.1} parent=1 // pred_fallthru
      _
    // Predicated region
    $region34: #{tpu_custom_call.1} parent=1 // pred_check
      _
    $region35: #{tpu_custom_call.1} parent=1 // pred_check_branch
      %74 = sbr.rel (0) target = $region37
    $region36: #{tpu_custom_call.1} parent=1 // pred_region
      %75 = dma.done [#allocation6], 256
    $region37: #{tpu_custom_call.1} parent=1 // pred_fallthru
      _
    // Predicated region
    $region38: #{tpu_custom_call.1} parent=1 // pred_check
      _
    $region39: #{tpu_custom_call.1} parent=1 // pred_check_branch
      %77 = sbr.rel (0) target = $region41
    $region40: #{tpu_custom_call.1} parent=1 // pred_region
      %78 = dma.done [#allocation6], 2048
    $region41: #{tpu_custom_call.1} parent=1 // pred_fallthru
      _
    // Predicated region
    $region42: #{tpu_custom_call.1} parent=1 // pred_check
      _
    $region43: #{tpu_custom_call.1} parent=1 // pred_check_branch
      %80 = sbr.rel (0) target = $region45
    $region44: #{tpu_custom_call.1} parent=1 // pred_region
      %81 = dma.done [#allocation9], 2048
    $region45: #{tpu_custom_call.1} parent=1 // pred_fallthru
      _
    %v82 = vld [vmem:[#allocation2] sm:$0xff]
    %v83 = vld [vmem:[#allocation2 + $0x8] sm:$0xff]
    %v84 = vld [vmem:[#allocation5] sm:$0xff]
    %v85 = vld [vmem:[#allocation5 + $0x8] sm:$0xff]
    %v86 = vld [vmem:[%s2] sm:$0x1]
    %v88 = vlaneseq
    %v89 = vshrl.u32 %v88, 7
    %v90 = vsub.s32 0, %v89
    %v91 = vrot.slane %v86, %v90
    %vm93 = vcmask 130048
    %v95 = vsel %vm93, %v82, 0
    %v98 = vsel %vm93, %v83, 0
    %100 = vmatprep.subr.mxu0 0.0
    %101 = vmatpush1.msra.mxu0 %v84
    %102 = vmatprep.subr.mxu0 0.0
    %103 = vmatpush1.msra.mxu0 %v85
    %104 = vmatprep.subr.mxu0 0.0
    %105 = vmatpush1.msra.mxu0 0.0
    %106 = vmatprep.subr.mxu0 0.0
    %107 = vmatpush1.msra.mxu0 0.0
    %108 = vmatprep.subr.mxu0 0.0
    %109 = vmatpush1.msra.mxu0 0.0
    %110 = vmatprep.subr.mxu0 0.0
    %111 = vmatpush1.msra.mxu0 0.0
    %112 = vmatprep.subr.mxu0 0.0
    %113 = vmatpush1.msra.mxu0 0.0
    %114 = vmatprep.subr.mxu0 0.0
    %115 = vmatpush1.msra.mxu0 0.0
    %116 = vmatprep.subr.mxu0 0.0
    %117 = vmatpush1.msra.mxu0 0.0
    %118 = vmatprep.subr.mxu0 0.0
    %119 = vmatpush1.msra.mxu0 0.0
    %120 = vmatprep.subr.mxu0 0.0
    %121 = vmatpush1.msra.mxu0 0.0
    %122 = vmatprep.subr.mxu0 0.0
    %123 = vmatpush1.msra.mxu0 0.0
    %124 = vmatprep.subr.mxu0 0.0
    %125 = vmatpush1.msra.mxu0 0.0
    %126 = vmatprep.subr.mxu0 0.0
    %127 = vmatpush1.msra.mxu0 0.0
    %128 = vmatprep.subr.mxu0 0.0
    %129 = vmatpush1.msra.mxu0 0.0
    %130 = vmatprep.subr.mxu0 0.0
    %131 = vmatpush1.msra.mxu0 0.0
    %132 = vmatprep.subr.mxu0 0.0
    %133 = vmatpush1.msra.mxu0 0.0
    %134 = vmatprep.subr.mxu0 0.0
    %135 = vmatpush1.msra.mxu0 0.0
    %136 = vmatprep.subr.mxu0 0.0
    %137 = vmatpush1.msra.mxu0 0.0
    %138 = vmatprep.subr.mxu0 0.0
    %139 = vmatpush1.msra.mxu0 0.0
    %140 = vmatprep.subr.mxu0 0.0
    %141 = vmatpush1.msra.mxu0 0.0
    %142 = vmatprep.subr.mxu0 0.0
    %143 = vmatpush1.msra.mxu0 0.0
    %144 = vmatprep.subr.mxu0 0.0
    %145 = vmatpush1.msra.mxu0 0.0
    %146 = vmatprep.subr.mxu0 0.0
    %147 = vmatpush1.msra.mxu0 0.0
    %148 = vmatprep.subr.mxu0 0.0
    %149 = vmatpush1.msra.mxu0 0.0
    %150 = vmatprep.subr.mxu0 0.0
    %151 = vmatpush1.msra.mxu0 0.0
    %152 = vmatprep.subr.mxu0 0.0
    %153 = vmatpush1.msra.mxu0 0.0
    %154 = vmatprep.subr.mxu0 0.0
    %155 = vmatpush1.msra.mxu0 0.0
    %156 = vmatprep.subr.mxu0 0.0
    %157 = vmatpush1.msra.mxu0 0.0
    %158 = vmatprep.subr.mxu0 0.0
    %159 = vmatpush1.msra.mxu0 0.0
    %160 = vmatprep.subr.mxu0 0.0
    %161 = vmatpush1.msra.mxu0 0.0
    %162 = vmatprep.subr.mxu0 0.0
    %163 = vmatpush1.msra.mxu0 0.0
    %164 = vmatprep.mubr.f32.mxu0 0.0
    %165 = vmatmul.mubr.f32.gmra.mrb[0].mxu0 %v95
    %v166 = vpop.f32.mrb[0].mxu0
    %v167 = vadd.f32 %v91, %v166
    %v168 = vpop.f32.mrb[0].mxu0
    %169 = vmatprep.mubr.f32.mxu0 0.0
    %170 = vmatmul.mubr.f32.gmra.mrb[0].mxu0 %v98
    %v171 = vpop.f32.mrb[0].mxu0
    %v172 = vadd.f32 %v91, %v171
    %v173 = vpop.f32.mrb[0].mxu0
    %174 = vdwg.mxu0
    %v175 = vmul.f32 %v167, 0.2
    %v176 = vmul.f32 %v172, 0.2
    %v177 = vmax.f32 %v167, %v175
    %v178 = vmax.f32 %v172, %v176
    %v179 = vld [vmem:[#allocation7] sm:$0xff]
    %v180 = vld [vmem:[#allocation7 + $0x8] sm:$0xff]
    %v181 = vld [vmem:[#allocation7 + $0x10] sm:$0xff]
    %v182 = vld [vmem:[#allocation7 + $0x18] sm:$0xff]
    %v183 = vld [vmem:[#allocation7 + $0x20] sm:$0xff]
    %v184 = vld [vmem:[#allocation7 + $0x28] sm:$0xff]
    %v185 = vld [vmem:[#allocation7 + $0x30] sm:$0xff]
    %v186 = vld [vmem:[#allocation7 + $0x38] sm:$0xff]
    %v187 = vld [vmem:[#allocation7 + $0x40] sm:$0xff]
    %v188 = vld [vmem:[#allocation7 + $0x48] sm:$0xff]
    %v189 = vld [vmem:[#allocation7 + $0x50] sm:$0xff]
    %v190 = vld [vmem:[#allocation7 + $0x58] sm:$0xff]
    %v191 = vld [vmem:[#allocation7 + $0x60] sm:$0xff]
    %v192 = vld [vmem:[#allocation7 + $0x68] sm:$0xff]
    %v193 = vld [vmem:[#allocation7 + $0x70] sm:$0xff]
    %v194 = vld [vmem:[#allocation7 + $0x78] sm:$0xff]
    %v195 = vld [vmem:[%s4] sm:$0x1]
    %v197 = vlaneseq
    %v198 = vshrl.u32 %v197, 7
    %v199 = vsub.s32 0, %v198
    %v200 = vrot.slane %v195, %v199
    %202 = vmatprep.subr.mxu0 0.0
    %203 = vmatpush1.msra.mxu0 %v179
    %204 = vmatprep.subr.mxu0 0.0
    %205 = vmatpush1.msra.mxu0 %v180
    %206 = vmatprep.subr.mxu0 0.0
    %207 = vmatpush1.msra.mxu0 %v181
    %208 = vmatprep.subr.mxu0 0.0
    %209 = vmatpush1.msra.mxu0 %v182
    %210 = vmatprep.subr.mxu0 0.0
    %211 = vmatpush1.msra.mxu0 %v183
    %212 = vmatprep.subr.mxu0 0.0
    %213 = vmatpush1.msra.mxu0 %v184
    %214 = vmatprep.subr.mxu0 0.0
    %215 = vmatpush1.msra.mxu0 %v185
    %216 = vmatprep.subr.mxu0 0.0
    %217 = vmatpush1.msra.mxu0 %v186
    %218 = vmatprep.subr.mxu0 0.0
    %219 = vmatpush1.msra.mxu0 %v187
    %220 = vmatprep.subr.mxu0 0.0
    %221 = vmatpush1.msra.mxu0 %v188
    %222 = vmatprep.subr.mxu0 0.0
    %223 = vmatpush1.msra.mxu0 %v189
    %224 = vmatprep.subr.mxu0 0.0
    %225 = vmatpush1.msra.mxu0 %v190
    %226 = vmatprep.subr.mxu0 0.0
    %227 = vmatpush1.msra.mxu0 %v191
    %228 = vmatprep.subr.mxu0 0.0
    %229 = vmatpush1.msra.mxu0 %v192
    %230 = vmatprep.subr.mxu0 0.0
    %231 = vmatpush1.msra.mxu0 %v193
    %232 = vmatprep.subr.mxu0 0.0
    %233 = vmatpush1.msra.mxu0 %v194
    %234 = vmatprep.subr.mxu0 0.0
    %235 = vmatpush1.msra.mxu0 0.0
    %236 = vmatprep.subr.mxu0 0.0
    %237 = vmatpush1.msra.mxu0 0.0
    %238 = vmatprep.subr.mxu0 0.0
    %239 = vmatpush1.msra.mxu0 0.0
    %240 = vmatprep.subr.mxu0 0.0
    %241 = vmatpush1.msra.mxu0 0.0
    %242 = vmatprep.subr.mxu0 0.0
    %243 = vmatpush1.msra.mxu0 0.0
    %244 = vmatprep.subr.mxu0 0.0
    %245 = vmatpush1.msra.mxu0 0.0
    %246 = vmatprep.subr.mxu0 0.0
    %247 = vmatpush1.msra.mxu0 0.0
    %248 = vmatprep.subr.mxu0 0.0
    %249 = vmatpush1.msra.mxu0 0.0
    %250 = vmatprep.subr.mxu0 0.0
    %251 = vmatpush1.msra.mxu0 0.0
    %252 = vmatprep.subr.mxu0 0.0
    %253 = vmatpush1.msra.mxu0 0.0
    %254 = vmatprep.subr.mxu0 0.0
    %255 = vmatpush1.msra.mxu0 0.0
    %256 = vmatprep.subr.mxu0 0.0
    %257 = vmatpush1.msra.mxu0 0.0
    %258 = vmatprep.subr.mxu0 0.0
    %259 = vmatpush1.msra.mxu0 0.0
    %260 = vmatprep.subr.mxu0 0.0
    %261 = vmatpush1.msra.mxu0 0.0
    %262 = vmatprep.subr.mxu0 0.0
    %263 = vmatpush1.msra.mxu0 0.0
    %264 = vmatprep.subr.mxu0 0.0
    %265 = vmatpush1.msra.mxu0 0.0
    %266 = vmatprep.mubr.f32.mxu0 0.0
    %267 = vmatmul.mubr.f32.gmra.mrb[0].mxu0 %v177
    %v268 = vpop.f32.mrb[0].mxu0
    %v269 = vadd.f32 %v200, %v268
    %v270 = vpop.f32.mrb[0].mxu0
    %271 = vmatprep.mubr.f32.mxu0 0.0
    %272 = vmatmul.mubr.f32.gmra.mrb[0].mxu0 %v178
    %v273 = vpop.f32.mrb[0].mxu0
    %v274 = vadd.f32 %v200, %v273
    %v275 = vpop.f32.mrb[0].mxu0
    %276 = vdwg.mxu0
    %v277 = vmul.f32 %v269, 0.2
    %v278 = vmul.f32 %v274, 0.2
    %v279 = vmax.f32 %v269, %v277
    %v280 = vmax.f32 %v274, %v278
    %v281 = vrot.slane %v279, 4
    %v282 = vadd.f32 %v279, %v281
    %v283 = vrot.slane %v282, 2
    %v284 = vadd.f32 %v282, %v283
    %v285 = vrot.slane %v284, 1
    %v286 = vadd.f32 %v284, %v285
    %v287 = vrot.slane %v280, 4
    %v288 = vadd.f32 %v280, %v287
    %v289 = vrot.slane %v288, 2
    %v290 = vadd.f32 %v288, %v289
    %v291 = vrot.slane %v290, 1
    %v292 = vadd.f32 %v290, %v291
    %v293 = vld [vmem:[#allocation8] sm:$0xff]
    %v294 = vld [vmem:[#allocation8 + $0x8] sm:$0xff]
    %v295 = vld [vmem:[#allocation8 + $0x10] sm:$0xff]
    %v296 = vld [vmem:[#allocation8 + $0x18] sm:$0xff]
    %v297 = vld [vmem:[#allocation8 + $0x20] sm:$0xff]
    %v298 = vld [vmem:[#allocation8 + $0x28] sm:$0xff]
    %v299 = vld [vmem:[#allocation8 + $0x30] sm:$0xff]
    %v300 = vld [vmem:[#allocation8 + $0x38] sm:$0xff]
    %v301 = vld [vmem:[#allocation8 + $0x40] sm:$0xff]
    %v302 = vld [vmem:[#allocation8 + $0x48] sm:$0xff]
    %v303 = vld [vmem:[#allocation8 + $0x50] sm:$0xff]
    %v304 = vld [vmem:[#allocation8 + $0x58] sm:$0xff]
    %v305 = vld [vmem:[#allocation8 + $0x60] sm:$0xff]
    %v306 = vld [vmem:[#allocation8 + $0x68] sm:$0xff]
    %v307 = vld [vmem:[#allocation8 + $0x70] sm:$0xff]
    %v308 = vld [vmem:[#allocation8 + $0x78] sm:$0xff]
    %v309 = vld [vmem:[%s6] sm:$0x1]
    %v311 = vlaneseq
    %v312 = vshrl.u32 %v311, 7
    %v313 = vsub.s32 0, %v312
    %v314 = vrot.slane %v309, %v313
    %vm318 = vcmask 1041409
    %v319 = vsel %vm318, %v292, %v286
    %321 = vmatprep.subr.mxu0 0.0
    %322 = vmatpush1.msra.mxu0 %v293
    %323 = vmatprep.subr.mxu0 0.0
    %324 = vmatpush1.msra.mxu0 %v294
    %325 = vmatprep.subr.mxu0 0.0
    %326 = vmatpush1.msra.mxu0 %v295
    %327 = vmatprep.subr.mxu0 0.0
    %328 = vmatpush1.msra.mxu0 %v296
    %329 = vmatprep.subr.mxu0 0.0
    %330 = vmatpush1.msra.mxu0 %v297
    %331 = vmatprep.subr.mxu0 0.0
    %332 = vmatpush1.msra.mxu0 %v298
    %333 = vmatprep.subr.mxu0 0.0
    %334 = vmatpush1.msra.mxu0 %v299
    %335 = vmatprep.subr.mxu0 0.0
    %336 = vmatpush1.msra.mxu0 %v300
    %337 = vmatprep.subr.mxu0 0.0
    %338 = vmatpush1.msra.mxu0 %v301
    %339 = vmatprep.subr.mxu0 0.0
    %340 = vmatpush1.msra.mxu0 %v302
    %341 = vmatprep.subr.mxu0 0.0
    %342 = vmatpush1.msra.mxu0 %v303
    %343 = vmatprep.subr.mxu0 0.0
    %344 = vmatpush1.msra.mxu0 %v304
    %345 = vmatprep.subr.mxu0 0.0
    %346 = vmatpush1.msra.mxu0 %v305
    %347 = vmatprep.subr.mxu0 0.0
    %348 = vmatpush1.msra.mxu0 %v306
    %349 = vmatprep.subr.mxu0 0.0
    %350 = vmatpush1.msra.mxu0 %v307
    %351 = vmatprep.subr.mxu0 0.0
    %352 = vmatpush1.msra.mxu0 %v308
    %353 = vmatprep.subr.mxu0 0.0
    %354 = vmatpush1.msra.mxu0 0.0
    %355 = vmatprep.subr.mxu0 0.0
    %356 = vmatpush1.msra.mxu0 0.0
    %357 = vmatprep.subr.mxu0 0.0
    %358 = vmatpush1.msra.mxu0 0.0
    %359 = vmatprep.subr.mxu0 0.0
    %360 = vmatpush1.msra.mxu0 0.0
    %361 = vmatprep.subr.mxu0 0.0
    %362 = vmatpush1.msra.mxu0 0.0
    %363 = vmatprep.subr.mxu0 0.0
    %364 = vmatpush1.msra.mxu0 0.0
    %365 = vmatprep.subr.mxu0 0.0
    %366 = vmatpush1.msra.mxu0 0.0
    %367 = vmatprep.subr.mxu0 0.0
    %368 = vmatpush1.msra.mxu0 0.0
    %369 = vmatprep.subr.mxu0 0.0
    %370 = vmatpush1.msra.mxu0 0.0
    %371 = vmatprep.subr.mxu0 0.0
    %372 = vmatpush1.msra.mxu0 0.0
    %373 = vmatprep.subr.mxu0 0.0
    %374 = vmatpush1.msra.mxu0 0.0
    %375 = vmatprep.subr.mxu0 0.0
    %376 = vmatpush1.msra.mxu0 0.0
    %377 = vmatprep.subr.mxu0 0.0
    %378 = vmatpush1.msra.mxu0 0.0
    %379 = vmatprep.subr.mxu0 0.0
    %380 = vmatpush1.msra.mxu0 0.0
    %381 = vmatprep.subr.mxu0 0.0
    %382 = vmatpush1.msra.mxu0 0.0
    %383 = vmatprep.subr.mxu0 0.0
    %384 = vmatpush1.msra.mxu0 0.0
    %385 = vmatprep.mubr.f32.mxu0 0.0
    %386 = vmatmul.mubr.f32.gmra.mrb[0].mxu0 %v319
    %v387 = vpop.f32.mrb[0].mxu0
    %v388 = vadd.f32 %v314, %v387
    %v389 = vpop.f32.mrb[0].mxu0
    %390 = vdwg.mxu0
    %391 = vst [vmem:[#allocation10] sm:$0x3] %v388
    // Predicated region
    $region46: #{tpu_custom_call.1} parent=1 // pred_check
      _
    $region47: #{tpu_custom_call.1} parent=1 // pred_check_branch
      %393 = sbr.rel (0) target = $region49
    $region48: #{tpu_custom_call.1} parent=1 // pred_region
      %s395 = ssub.s32 32, 32
      %396 = vsyncadd [#allocation4], %s395
      %s398 = sshll.u32 [#allocation10], 4
      %s399 = int_to_ptr.vmem [resolvable:$true] %s398
      %401 = dma.vmem_to_hbm [thread:$0]  %s399, 32, %s7, [#allocation4]
    $region49: #{tpu_custom_call.1} parent=1 // pred_fallthru
      _
    // Predicated region
    $region50: #{tpu_custom_call.1} parent=1 // pred_check
      _
    $region51: #{tpu_custom_call.1} parent=1 // pred_check_branch
      %403 = sbr.rel (0) target = $region53
    $region52: #{tpu_custom_call.1} parent=1 // pred_region
      %404 = dma.done [#allocation4], 32
    $region53: #{tpu_custom_call.1} parent=1 // pred_fallthru
      _
    %405 = vsyncpa [#allocation3], 1
    %406 = vsyncpa [#allocation6], 1
    %407 = vsyncpa [#allocation9], 1
    %408 = vsyncpa [#allocation4], 1

</llo_original>
